<compile_context>
chip_gen: v7x
topology: tpu7x:2x2x1
jax: 0.10.0
libtpu: 0.0.40
codegen_flags: <defaults>
</compile_context>

<pallas_src>
import functools

import jax
import jax.numpy as jnp
from jax import lax
from jax.experimental import pallas as pl
from jax.experimental.pallas import tpu as pltpu


def _recurrent_block_kernel(x_ref, w_ref, b_ref, o_ref, *, H, W):
    # x_ref: (1, C, H*W)   flattened NCHW image (lane-dense spatial axis)
    # w_ref: (4, C, 9*C)   per-conv weights, K index = (kh*3+kw)*Cin + ci
    # b_ref: (4, C, 1)     per-conv biases (broadcast along lanes)
    # o_ref: (1, C, H*W)
    C = x_ref.shape[1]
    HW = H * W

    # Hoisted invariants shared by all 4 convs / all taps.
    col = lax.broadcasted_iota(jnp.int32, (C, HW), 1) % W
    valid_left = col >= 1          # tap dx = -1 needs input col x-1 >= 0
    valid_right = col < (W - 1)    # tap dx = +1 needs input col x+1 <  W
    zpad = jnp.zeros((C, W + 1), jnp.float32)

    def conv_relu(x, idx):
        # x: (C, HW) float32.  Zero halo of W+1 on each side handles the
        # row (dy) boundary; the column masks handle the dx boundary.
        xp = jnp.concatenate([zpad, x, zpad], axis=1)   # (C, HW + 2W + 2)
        taps = []
        for kh in range(3):
            dy = kh - 1
            for kw in range(3):
                dx = kw - 1
                start = (W + 1) + dy * W + dx            # static, >= 0
                tap = xp[:, start:start + HW]            # (C, HW)
                if dx == -1:
                    tap = jnp.where(valid_left, tap, 0.0)
                elif dx == 1:
                    tap = jnp.where(valid_right, tap, 0.0)
                taps.append(tap)
        patches = jnp.concatenate(taps, axis=0)          # (9*C, HW)
        # Single lane-dense matmul: (C, 9C) @ (9C, HW) -> (C, HW)
        y = jnp.dot(w_ref[idx].astype(jnp.float32), patches,
                    preferred_element_type=jnp.float32)
        y = y + b_ref[idx].astype(jnp.float32)           # (C,1) bcast over lanes
        return jnp.maximum(y, 0.0)

    x = x_ref[0].astype(jnp.float32)                     # (C, HW)
    h1 = conv_relu(x, 0)
    res1 = conv_relu(h1, 1) + x
    h2 = conv_relu(res1, 2)
    res2 = conv_relu(h2, 3) + x
    o_ref[0] = res2.astype(o_ref.dtype)


def recurrent_block_forward(x_nchw, params):
    """Pallas implementation of recurrent_block.forward (input/output NCHW)."""
    N, C, H, W = x_nchw.shape
    HW = H * W
    x_flat = x_nchw.reshape(N, C, HW)   # contiguous collapse -> free reshape

    def prep_w(w_hwio):
        # HWIO (3,3,Cin,Cout) -> (Cout, 9*Cin) with K index = (kh*3+kw)*Cin + ci
        return jnp.transpose(w_hwio, (3, 0, 1, 2)).reshape(C, 9 * C)

    w_all = jnp.stack([prep_w(params[f"w{i}"]) for i in (1, 2, 3, 4)])        # (4,C,9C)
    b_all = jnp.stack([params[f"b{i}"].reshape(C, 1) for i in (1, 2, 3, 4)])  # (4,C,1)

    kernel = functools.partial(_recurrent_block_kernel, H=H, W=W)
    out_flat = pl.pallas_call(
        kernel,
        out_shape=jax.ShapeDtypeStruct((N, C, HW), x_nchw.dtype),
        grid_spec=pltpu.PrefetchScalarGridSpec(
            num_scalar_prefetch=0,
            grid=(N,),
            in_specs=[
                pl.BlockSpec((1, C, HW), lambda n: (n, 0, 0)),
                pl.BlockSpec((4, C, 9 * C), lambda n: (0, 0, 0)),
                pl.BlockSpec((4, C, 1), lambda n: (0, 0, 0)),
            ],
            out_specs=pl.BlockSpec((1, C, HW), lambda n: (n, 0, 0)),
        ),
        compiler_params=pltpu.CompilerParams(dimension_semantics=("parallel",)),
    )(x_flat, w_all, b_all)
    return out_flat.reshape(N, C, H, W)


# ----------------------------- reference & setup -----------------------------

def _conv_ref(x, w, b):
    y = lax.conv_general_dilated(
        x, w, window_strides=(1, 1), padding="SAME",
        dimension_numbers=("NHWC", "HWIO", "NHWC"))
    return y + b[None, None, None, :]


def recurrent_block_reference(x_nchw, params):
    x = jnp.transpose(x_nchw, (0, 2, 3, 1))
    relu = jax.nn.relu
    res1 = relu(_conv_ref(relu(_conv_ref(x, params["w1"], params["b1"])),
                          params["w2"], params["b2"])) + x
    res2 = relu(_conv_ref(relu(_conv_ref(res1, params["w3"], params["b3"])),
                          params["w4"], params["b4"])) + x
    return jnp.transpose(res2, (0, 3, 1, 2))


def init_params(key, num_channels):
    # Mimics PyTorch Conv2d default init: U(-k, k), k = 1/sqrt(fan_in), fan_in = Cin*3*3.
    k = 1.0 / jnp.sqrt(jnp.float32(num_channels * 3 * 3))
    params = {}
    keys = jax.random.split(key, 8)
    for i in range(4):
        w = jax.random.uniform(keys[2 * i], (3, 3, num_channels, num_channels),
                               jnp.float32, minval=-k, maxval=k)
        b = jax.random.uniform(keys[2 * i + 1], (num_channels,),
                               jnp.float32, minval=-k, maxval=k)
        params[f"w{i + 1}"] = w
        params[f"b{i + 1}"] = b
    return params


if __name__ == "__main__":
    key = jax.random.PRNGKey(0)
    kx, kp = jax.random.split(key)

    N, C, H, W = 2, 4, 16, 16
    x = jax.random.normal(kx, (N, C, H, W), jnp.float32)
    params = init_params(kp, C)

    out = recurrent_block_forward(x, params)
    out = jax.block_until_ready(out)

    ref = recurrent_block_reference(x, params)
    assert out.shape == (N, C, H, W)
    assert jnp.allclose(out, ref, atol=1e-4, rtol=1e-4), "mismatch vs JAX reference"

    print("KERNEL_OK")
</pallas_src>

<mosaic_0001>
module attributes {stable_mosaic.version = 11 : i64} {
  func.func @_recurrent_block_kernel(%arg0: i32, %arg1: memref<1x4x256xf32, #tpu.memory_space<vmem>>, %arg2: memref<4x4x36xf32, #tpu.memory_space<vmem>>, %arg3: memref<4x4x1xf32, #tpu.memory_space<vmem>>, %arg4: memref<1x4x256xf32, #tpu.memory_space<vmem>>) attributes {dimension_semantics = [#tpu.dimension_semantics<parallel>], iteration_bounds = array<i64: 2>, scalar_prefetch = 0 : i64, scratch_operands = 0 : i64, tpu.core_type = #tpu.core_type<tc>, window_params = [{transform_indices = @transform_0, window_bounds = array<i64: 1, 4, 256>}, {pipeline_mode = #tpu.pipeline_mode<synchronous>, transform_indices = @transform_1, window_bounds = array<i64: 4, 4, 36>}, {pipeline_mode = #tpu.pipeline_mode<synchronous>, transform_indices = @transform_2, window_bounds = array<i64: 4, 4, 1>}, {transform_indices = @transform_3, window_bounds = array<i64: 1, 4, 256>}]} {
    %0 = tpu.iota {dimensions = array<i32: 1>} : vector<4x256xi32>
    %c16_i32 = arith.constant 16 : i32
    %c0_i32 = arith.constant 0 : i32
    %1 = arith.cmpi eq, %c16_i32, %c0_i32 : i32
    %c1_i32 = arith.constant 1 : i32
    %2 = arith.select %1, %c1_i32, %c16_i32 : i32
    %3 = vector.broadcast %2 : i32 to vector<4x256xi32>
    %4 = arith.remsi %0, %3 : vector<4x256xi32>
    %c0_i32_0 = arith.constant 0 : i32
    %5 = vector.broadcast %c0_i32_0 : i32 to vector<4x256xi32>
    %6 = arith.cmpi ne, %4, %5 : vector<4x256xi32>
    %c0_i32_1 = arith.constant 0 : i32
    %7 = vector.broadcast %c0_i32_1 : i32 to vector<4x256xi32>
    %8 = arith.cmpi slt, %4, %7 : vector<4x256xi32>
    %c0_i32_2 = arith.constant 0 : i32
    %9 = arith.cmpi slt, %2, %c0_i32_2 : i32
    %10 = vector.broadcast %9 : i1 to vector<4x256xi1>
    %11 = vector.broadcast %10 : vector<4x256xi1> to vector<4x256xi1>
    %12 = arith.xori %8, %11 : vector<4x256xi1>
    %13 = arith.andi %12, %6 : vector<4x256xi1>
    %14 = vector.broadcast %2 : i32 to vector<4x256xi32>
    %15 = arith.addi %4, %14 : vector<4x256xi32>
    %16 = arith.select %13, %15, %4 : vector<4x256xi1>, vector<4x256xi32>
    %c1_i32_3 = arith.constant 1 : i32
    %17 = vector.broadcast %c1_i32_3 : i32 to vector<4x256xi32>
    %18 = arith.cmpi sge, %16, %17 : vector<4x256xi32>
    %c15_i32 = arith.constant 15 : i32
    %19 = vector.broadcast %c15_i32 : i32 to vector<4x256xi32>
    %20 = arith.cmpi slt, %16, %19 : vector<4x256xi32>
    %cst = arith.constant 0.000000e+00 : f32
    %21 = vector.broadcast %cst : f32 to vector<4x17xf32>
    %c0 = arith.constant 0 : index
    %c0_4 = arith.constant 0 : index
    %c0_5 = arith.constant 0 : index
    %22 = vector.load %arg1[%c0, %c0_4, %c0_5] : memref<1x4x256xf32, #tpu.memory_space<vmem>>, vector<1x4x256xf32>
    %23 = vector.shape_cast %22 : vector<1x4x256xf32> to vector<4x256xf32>
    %24 = tpu.concatenate %21, %23, %21 in 1 : vector<4x17xf32>, vector<4x256xf32>, vector<4x17xf32> -> vector<4x290xf32>
    %25 = vector.extract_strided_slice %24 {offsets = [0, 0], sizes = [4, 256], strides = [1, 1]} : vector<4x290xf32> to vector<4x256xf32>
    %cst_6 = arith.constant 0.000000e+00 : f32
    %26 = vector.broadcast %cst_6 : f32 to vector<4x256xf32>
    %27 = arith.select %18, %25, %26 : vector<4x256xi1>, vector<4x256xf32>
    %28 = vector.extract_strided_slice %24 {offsets = [0, 1], sizes = [4, 256], strides = [1, 1]} : vector<4x290xf32> to vector<4x256xf32>
    %29 = vector.extract_strided_slice %24 {offsets = [0, 2], sizes = [4, 256], strides = [1, 1]} : vector<4x290xf32> to vector<4x256xf32>
    %cst_7 = arith.constant 0.000000e+00 : f32
    %30 = vector.broadcast %cst_7 : f32 to vector<4x256xf32>
    %31 = arith.select %20, %29, %30 : vector<4x256xi1>, vector<4x256xf32>
    %32 = vector.extract_strided_slice %24 {offsets = [0, 16], sizes = [4, 256], strides = [1, 1]} : vector<4x290xf32> to vector<4x256xf32>
    %cst_8 = arith.constant 0.000000e+00 : f32
    %33 = vector.broadcast %cst_8 : f32 to vector<4x256xf32>
    %34 = arith.select %18, %32, %33 : vector<4x256xi1>, vector<4x256xf32>
    %35 = vector.extract_strided_slice %24 {offsets = [0, 17], sizes = [4, 256], strides = [1, 1]} : vector<4x290xf32> to vector<4x256xf32>
    %36 = vector.extract_strided_slice %24 {offsets = [0, 18], sizes = [4, 256], strides = [1, 1]} : vector<4x290xf32> to vector<4x256xf32>
    %cst_9 = arith.constant 0.000000e+00 : f32
    %37 = vector.broadcast %cst_9 : f32 to vector<4x256xf32>
    %38 = arith.select %20, %36, %37 : vector<4x256xi1>, vector<4x256xf32>
    %39 = vector.extract_strided_slice %24 {offsets = [0, 32], sizes = [4, 256], strides = [1, 1]} : vector<4x290xf32> to vector<4x256xf32>
    %cst_10 = arith.constant 0.000000e+00 : f32
    %40 = vector.broadcast %cst_10 : f32 to vector<4x256xf32>
    %41 = arith.select %18, %39, %40 : vector<4x256xi1>, vector<4x256xf32>
    %42 = vector.extract_strided_slice %24 {offsets = [0, 33], sizes = [4, 256], strides = [1, 1]} : vector<4x290xf32> to vector<4x256xf32>
    %43 = vector.extract_strided_slice %24 {offsets = [0, 34], sizes = [4, 256], strides = [1, 1]} : vector<4x290xf32> to vector<4x256xf32>
    %cst_11 = arith.constant 0.000000e+00 : f32
    %44 = vector.broadcast %cst_11 : f32 to vector<4x256xf32>
    %45 = arith.select %20, %43, %44 : vector<4x256xi1>, vector<4x256xf32>
    %46 = tpu.concatenate %27, %28, %31, %34, %35, %38, %41, %42, %45 in 0 : vector<4x256xf32>, vector<4x256xf32>, vector<4x256xf32>, vector<4x256xf32>, vector<4x256xf32>, vector<4x256xf32>, vector<4x256xf32>, vector<4x256xf32>, vector<4x256xf32> -> vector<36x256xf32>
    %c0_12 = arith.constant 0 : index
    %c0_13 = arith.constant 0 : index
    %c0_14 = arith.constant 0 : index
    %47 = vector.load %arg2[%c0_12, %c0_13, %c0_14] : memref<4x4x36xf32, #tpu.memory_space<vmem>>, vector<1x4x36xf32>
    %48 = vector.shape_cast %47 : vector<1x4x36xf32> to vector<4x36xf32>
    %cst_15 = arith.constant dense<0.000000e+00> : vector<4x256xf32>
    %49 = tpu.matmul %48, %46, %cst_15 {dimension_numbers = #tpu.dot_dimension_numbers<[1], [0], [0], [1], [0, 0, 1, 1], [], []>} : vector<4x36xf32>, vector<36x256xf32>, vector<4x256xf32> -> vector<4x256xf32>
    %c0_16 = arith.constant 0 : index
    %c0_17 = arith.constant 0 : index
    %c0_18 = arith.constant 0 : index
    %50 = vector.load %arg3[%c0_16, %c0_17, %c0_18] : memref<4x4x1xf32, #tpu.memory_space<vmem>>, vector<1x4x1xf32>
    %51 = vector.shape_cast %50 : vector<1x4x1xf32> to vector<4x1xf32>
    %52 = vector.broadcast %51 : vector<4x1xf32> to vector<4x256xf32>
    %53 = arith.addf %49, %52 : vector<4x256xf32>
    %cst_19 = arith.constant 0.000000e+00 : f32
    %54 = vector.broadcast %cst_19 : f32 to vector<4x256xf32>
    %55 = arith.maximumf %53, %54 : vector<4x256xf32>
    %56 = tpu.concatenate %21, %55, %21 in 1 : vector<4x17xf32>, vector<4x256xf32>, vector<4x17xf32> -> vector<4x290xf32>
    %57 = vector.extract_strided_slice %56 {offsets = [0, 0], sizes = [4, 256], strides = [1, 1]} : vector<4x290xf32> to vector<4x256xf32>
    %cst_20 = arith.constant 0.000000e+00 : f32
    %58 = vector.broadcast %cst_20 : f32 to vector<4x256xf32>
    %59 = arith.select %18, %57, %58 : vector<4x256xi1>, vector<4x256xf32>
    %60 = vector.extract_strided_slice %56 {offsets = [0, 1], sizes = [4, 256], strides = [1, 1]} : vector<4x290xf32> to vector<4x256xf32>
    %61 = vector.extract_strided_slice %56 {offsets = [0, 2], sizes = [4, 256], strides = [1, 1]} : vector<4x290xf32> to vector<4x256xf32>
    %cst_21 = arith.constant 0.000000e+00 : f32
    %62 = vector.broadcast %cst_21 : f32 to vector<4x256xf32>
    %63 = arith.select %20, %61, %62 : vector<4x256xi1>, vector<4x256xf32>
    %64 = vector.extract_strided_slice %56 {offsets = [0, 16], sizes = [4, 256], strides = [1, 1]} : vector<4x290xf32> to vector<4x256xf32>
    %cst_22 = arith.constant 0.000000e+00 : f32
    %65 = vector.broadcast %cst_22 : f32 to vector<4x256xf32>
    %66 = arith.select %18, %64, %65 : vector<4x256xi1>, vector<4x256xf32>
    %67 = vector.extract_strided_slice %56 {offsets = [0, 17], sizes = [4, 256], strides = [1, 1]} : vector<4x290xf32> to vector<4x256xf32>
    %68 = vector.extract_strided_slice %56 {offsets = [0, 18], sizes = [4, 256], strides = [1, 1]} : vector<4x290xf32> to vector<4x256xf32>
    %cst_23 = arith.constant 0.000000e+00 : f32
    %69 = vector.broadcast %cst_23 : f32 to vector<4x256xf32>
    %70 = arith.select %20, %68, %69 : vector<4x256xi1>, vector<4x256xf32>
    %71 = vector.extract_strided_slice %56 {offsets = [0, 32], sizes = [4, 256], strides = [1, 1]} : vector<4x290xf32> to vector<4x256xf32>
    %cst_24 = arith.constant 0.000000e+00 : f32
    %72 = vector.broadcast %cst_24 : f32 to vector<4x256xf32>
    %73 = arith.select %18, %71, %72 : vector<4x256xi1>, vector<4x256xf32>
    %74 = vector.extract_strided_slice %56 {offsets = [0, 33], sizes = [4, 256], strides = [1, 1]} : vector<4x290xf32> to vector<4x256xf32>
    %75 = vector.extract_strided_slice %56 {offsets = [0, 34], sizes = [4, 256], strides = [1, 1]} : vector<4x290xf32> to vector<4x256xf32>
    %cst_25 = arith.constant 0.000000e+00 : f32
    %76 = vector.broadcast %cst_25 : f32 to vector<4x256xf32>
    %77 = arith.select %20, %75, %76 : vector<4x256xi1>, vector<4x256xf32>
    %78 = tpu.concatenate %59, %60, %63, %66, %67, %70, %73, %74, %77 in 0 : vector<4x256xf32>, vector<4x256xf32>, vector<4x256xf32>, vector<4x256xf32>, vector<4x256xf32>, vector<4x256xf32>, vector<4x256xf32>, vector<4x256xf32>, vector<4x256xf32> -> vector<36x256xf32>
    %c1 = arith.constant 1 : index
    %c0_26 = arith.constant 0 : index
    %c0_27 = arith.constant 0 : index
    %79 = vector.load %arg2[%c1, %c0_26, %c0_27] : memref<4x4x36xf32, #tpu.memory_space<vmem>>, vector<1x4x36xf32>
    %80 = vector.shape_cast %79 : vector<1x4x36xf32> to vector<4x36xf32>
    %cst_28 = arith.constant dense<0.000000e+00> : vector<4x256xf32>
    %81 = tpu.matmul %80, %78, %cst_28 {dimension_numbers = #tpu.dot_dimension_numbers<[1], [0], [0], [1], [0, 0, 1, 1], [], []>} : vector<4x36xf32>, vector<36x256xf32>, vector<4x256xf32> -> vector<4x256xf32>
    %c1_29 = arith.constant 1 : index
    %c0_30 = arith.constant 0 : index
    %c0_31 = arith.constant 0 : index
    %82 = vector.load %arg3[%c1_29, %c0_30, %c0_31] : memref<4x4x1xf32, #tpu.memory_space<vmem>>, vector<1x4x1xf32>
    %83 = vector.shape_cast %82 : vector<1x4x1xf32> to vector<4x1xf32>
    %84 = vector.broadcast %83 : vector<4x1xf32> to vector<4x256xf32>
    %85 = arith.addf %81, %84 : vector<4x256xf32>
    %cst_32 = arith.constant 0.000000e+00 : f32
    %86 = vector.broadcast %cst_32 : f32 to vector<4x256xf32>
    %87 = arith.maximumf %85, %86 : vector<4x256xf32>
    %88 = arith.addf %87, %23 : vector<4x256xf32>
    %89 = tpu.concatenate %21, %88, %21 in 1 : vector<4x17xf32>, vector<4x256xf32>, vector<4x17xf32> -> vector<4x290xf32>
    %90 = vector.extract_strided_slice %89 {offsets = [0, 0], sizes = [4, 256], strides = [1, 1]} : vector<4x290xf32> to vector<4x256xf32>
    %cst_33 = arith.constant 0.000000e+00 : f32
    %91 = vector.broadcast %cst_33 : f32 to vector<4x256xf32>
    %92 = arith.select %18, %90, %91 : vector<4x256xi1>, vector<4x256xf32>
    %93 = vector.extract_strided_slice %89 {offsets = [0, 1], sizes = [4, 256], strides = [1, 1]} : vector<4x290xf32> to vector<4x256xf32>
    %94 = vector.extract_strided_slice %89 {offsets = [0, 2], sizes = [4, 256], strides = [1, 1]} : vector<4x290xf32> to vector<4x256xf32>
    %cst_34 = arith.constant 0.000000e+00 : f32
    %95 = vector.broadcast %cst_34 : f32 to vector<4x256xf32>
    %96 = arith.select %20, %94, %95 : vector<4x256xi1>, vector<4x256xf32>
    %97 = vector.extract_strided_slice %89 {offsets = [0, 16], sizes = [4, 256], strides = [1, 1]} : vector<4x290xf32> to vector<4x256xf32>
    %cst_35 = arith.constant 0.000000e+00 : f32
    %98 = vector.broadcast %cst_35 : f32 to vector<4x256xf32>
    %99 = arith.select %18, %97, %98 : vector<4x256xi1>, vector<4x256xf32>
    %100 = vector.extract_strided_slice %89 {offsets = [0, 17], sizes = [4, 256], strides = [1, 1]} : vector<4x290xf32> to vector<4x256xf32>
    %101 = vector.extract_strided_slice %89 {offsets = [0, 18], sizes = [4, 256], strides = [1, 1]} : vector<4x290xf32> to vector<4x256xf32>
    %cst_36 = arith.constant 0.000000e+00 : f32
    %102 = vector.broadcast %cst_36 : f32 to vector<4x256xf32>
    %103 = arith.select %20, %101, %102 : vector<4x256xi1>, vector<4x256xf32>
    %104 = vector.extract_strided_slice %89 {offsets = [0, 32], sizes = [4, 256], strides = [1, 1]} : vector<4x290xf32> to vector<4x256xf32>
    %cst_37 = arith.constant 0.000000e+00 : f32
    %105 = vector.broadcast %cst_37 : f32 to vector<4x256xf32>
    %106 = arith.select %18, %104, %105 : vector<4x256xi1>, vector<4x256xf32>
    %107 = vector.extract_strided_slice %89 {offsets = [0, 33], sizes = [4, 256], strides = [1, 1]} : vector<4x290xf32> to vector<4x256xf32>
    %108 = vector.extract_strided_slice %89 {offsets = [0, 34], sizes = [4, 256], strides = [1, 1]} : vector<4x290xf32> to vector<4x256xf32>
    %cst_38 = arith.constant 0.000000e+00 : f32
    %109 = vector.broadcast %cst_38 : f32 to vector<4x256xf32>
    %110 = arith.select %20, %108, %109 : vector<4x256xi1>, vector<4x256xf32>
    %111 = tpu.concatenate %92, %93, %96, %99, %100, %103, %106, %107, %110 in 0 : vector<4x256xf32>, vector<4x256xf32>, vector<4x256xf32>, vector<4x256xf32>, vector<4x256xf32>, vector<4x256xf32>, vector<4x256xf32>, vector<4x256xf32>, vector<4x256xf32> -> vector<36x256xf32>
    %c2 = arith.constant 2 : index
    %c0_39 = arith.constant 0 : index
    %c0_40 = arith.constant 0 : index
    %112 = vector.load %arg2[%c2, %c0_39, %c0_40] : memref<4x4x36xf32, #tpu.memory_space<vmem>>, vector<1x4x36xf32>
    %113 = vector.shape_cast %112 : vector<1x4x36xf32> to vector<4x36xf32>
    %cst_41 = arith.constant dense<0.000000e+00> : vector<4x256xf32>
    %114 = tpu.matmul %113, %111, %cst_41 {dimension_numbers = #tpu.dot_dimension_numbers<[1], [0], [0], [1], [0, 0, 1, 1], [], []>} : vector<4x36xf32>, vector<36x256xf32>, vector<4x256xf32> -> vector<4x256xf32>
    %c2_42 = arith.constant 2 : index
    %c0_43 = arith.constant 0 : index
    %c0_44 = arith.constant 0 : index
    %115 = vector.load %arg3[%c2_42, %c0_43, %c0_44] : memref<4x4x1xf32, #tpu.memory_space<vmem>>, vector<1x4x1xf32>
    %116 = vector.shape_cast %115 : vector<1x4x1xf32> to vector<4x1xf32>
    %117 = vector.broadcast %116 : vector<4x1xf32> to vector<4x256xf32>
    %118 = arith.addf %114, %117 : vector<4x256xf32>
    %cst_45 = arith.constant 0.000000e+00 : f32
    %119 = vector.broadcast %cst_45 : f32 to vector<4x256xf32>
    %120 = arith.maximumf %118, %119 : vector<4x256xf32>
    %121 = tpu.concatenate %21, %120, %21 in 1 : vector<4x17xf32>, vector<4x256xf32>, vector<4x17xf32> -> vector<4x290xf32>
    %122 = vector.extract_strided_slice %121 {offsets = [0, 0], sizes = [4, 256], strides = [1, 1]} : vector<4x290xf32> to vector<4x256xf32>
    %cst_46 = arith.constant 0.000000e+00 : f32
    %123 = vector.broadcast %cst_46 : f32 to vector<4x256xf32>
    %124 = arith.select %18, %122, %123 : vector<4x256xi1>, vector<4x256xf32>
    %125 = vector.extract_strided_slice %121 {offsets = [0, 1], sizes = [4, 256], strides = [1, 1]} : vector<4x290xf32> to vector<4x256xf32>
    %126 = vector.extract_strided_slice %121 {offsets = [0, 2], sizes = [4, 256], strides = [1, 1]} : vector<4x290xf32> to vector<4x256xf32>
    %cst_47 = arith.constant 0.000000e+00 : f32
    %127 = vector.broadcast %cst_47 : f32 to vector<4x256xf32>
    %128 = arith.select %20, %126, %127 : vector<4x256xi1>, vector<4x256xf32>
    %129 = vector.extract_strided_slice %121 {offsets = [0, 16], sizes = [4, 256], strides = [1, 1]} : vector<4x290xf32> to vector<4x256xf32>
    %cst_48 = arith.constant 0.000000e+00 : f32
    %130 = vector.broadcast %cst_48 : f32 to vector<4x256xf32>
    %131 = arith.select %18, %129, %130 : vector<4x256xi1>, vector<4x256xf32>
    %132 = vector.extract_strided_slice %121 {offsets = [0, 17], sizes = [4, 256], strides = [1, 1]} : vector<4x290xf32> to vector<4x256xf32>
    %133 = vector.extract_strided_slice %121 {offsets = [0, 18], sizes = [4, 256], strides = [1, 1]} : vector<4x290xf32> to vector<4x256xf32>
    %cst_49 = arith.constant 0.000000e+00 : f32
    %134 = vector.broadcast %cst_49 : f32 to vector<4x256xf32>
    %135 = arith.select %20, %133, %134 : vector<4x256xi1>, vector<4x256xf32>
    %136 = vector.extract_strided_slice %121 {offsets = [0, 32], sizes = [4, 256], strides = [1, 1]} : vector<4x290xf32> to vector<4x256xf32>
    %cst_50 = arith.constant 0.000000e+00 : f32
    %137 = vector.broadcast %cst_50 : f32 to vector<4x256xf32>
    %138 = arith.select %18, %136, %137 : vector<4x256xi1>, vector<4x256xf32>
    %139 = vector.extract_strided_slice %121 {offsets = [0, 33], sizes = [4, 256], strides = [1, 1]} : vector<4x290xf32> to vector<4x256xf32>
    %140 = vector.extract_strided_slice %121 {offsets = [0, 34], sizes = [4, 256], strides = [1, 1]} : vector<4x290xf32> to vector<4x256xf32>
    %cst_51 = arith.constant 0.000000e+00 : f32
    %141 = vector.broadcast %cst_51 : f32 to vector<4x256xf32>
    %142 = arith.select %20, %140, %141 : vector<4x256xi1>, vector<4x256xf32>
    %143 = tpu.concatenate %124, %125, %128, %131, %132, %135, %138, %139, %142 in 0 : vector<4x256xf32>, vector<4x256xf32>, vector<4x256xf32>, vector<4x256xf32>, vector<4x256xf32>, vector<4x256xf32>, vector<4x256xf32>, vector<4x256xf32>, vector<4x256xf32> -> vector<36x256xf32>
    %c3 = arith.constant 3 : index
    %c0_52 = arith.constant 0 : index
    %c0_53 = arith.constant 0 : index
    %144 = vector.load %arg2[%c3, %c0_52, %c0_53] : memref<4x4x36xf32, #tpu.memory_space<vmem>>, vector<1x4x36xf32>
    %145 = vector.shape_cast %144 : vector<1x4x36xf32> to vector<4x36xf32>
    %cst_54 = arith.constant dense<0.000000e+00> : vector<4x256xf32>
    %146 = tpu.matmul %145, %143, %cst_54 {dimension_numbers = #tpu.dot_dimension_numbers<[1], [0], [0], [1], [0, 0, 1, 1], [], []>} : vector<4x36xf32>, vector<36x256xf32>, vector<4x256xf32> -> vector<4x256xf32>
    %c3_55 = arith.constant 3 : index
    %c0_56 = arith.constant 0 : index
    %c0_57 = arith.constant 0 : index
    %147 = vector.load %arg3[%c3_55, %c0_56, %c0_57] : memref<4x4x1xf32, #tpu.memory_space<vmem>>, vector<1x4x1xf32>
    %148 = vector.shape_cast %147 : vector<1x4x1xf32> to vector<4x1xf32>
    %149 = vector.broadcast %148 : vector<4x1xf32> to vector<4x256xf32>
    %150 = arith.addf %146, %149 : vector<4x256xf32>
    %cst_58 = arith.constant 0.000000e+00 : f32
    %151 = vector.broadcast %cst_58 : f32 to vector<4x256xf32>
    %152 = arith.maximumf %150, %151 : vector<4x256xf32>
    %153 = arith.addf %152, %23 : vector<4x256xf32>
    %c0_59 = arith.constant 0 : index
    %c0_60 = arith.constant 0 : index
    %c0_61 = arith.constant 0 : index
    %154 = vector.load %arg4[%c0_59, %c0_60, %c0_61] : memref<1x4x256xf32, #tpu.memory_space<vmem>>, vector<1x4x256xf32>
    %155 = vector.shape_cast %154 : vector<1x4x256xf32> to vector<4x256xf32>
    %156 = vector.shape_cast %153 : vector<4x256xf32> to vector<1x4x256xf32>
    tpu.vector_store %arg4[%c0_59, %c0_60, %c0_61], %156 {strides = array<i32>} : memref<1x4x256xf32, #tpu.memory_space<vmem>>, vector<1x4x256xf32>,
    return
  }
  func.func @transform_0(%arg0: i32) -> (i32, i32, i32) {
    %c0_i32 = arith.constant 0 : i32
    %c0_i32_0 = arith.constant 0 : i32
    %c0_i32_1 = arith.constant 0 : i32
    return %arg0, %c0_i32, %c0_i32_0 : i32, i32, i32
  }
  func.func @transform_1(%arg0: i32) -> (i32, i32, i32) {
    %c0_i32 = arith.constant 0 : i32
    %c0_i32_0 = arith.constant 0 : i32
    %c0_i32_1 = arith.constant 0 : i32
    %c0_i32_2 = arith.constant 0 : i32
    return %c0_i32, %c0_i32_0, %c0_i32_1 : i32, i32, i32
  }
  func.func @transform_2(%arg0: i32) -> (i32, i32, i32) {
    %c0_i32 = arith.constant 0 : i32
    %c0_i32_0 = arith.constant 0 : i32
    %c0_i32_1 = arith.constant 0 : i32
    %c0_i32_2 = arith.constant 0 : i32
    return %c0_i32, %c0_i32_0, %c0_i32_1 : i32, i32, i32
  }
  func.func @transform_3(%arg0: i32) -> (i32, i32, i32) {
    %c0_i32 = arith.constant 0 : i32
    %c0_i32_0 = arith.constant 0 : i32
    %c0_i32_1 = arith.constant 0 : i32
    return %arg0, %c0_i32, %c0_i32_0 : i32, i32, i32
  }
}

</mosaic_0001>

<llo_original>
// kernel: tpu_custom_call.1
$region0: #{tpu_custom_call.1}
  #allocation0 [shape = 'u32[]', space=smem, size = 0x4, offset = 0x4, fixed_abs, tag = 'smem constant byte address 0x4 - core index']
  #allocation1 [shape = 'u32[144,128]{1,0:T(1,128)}', space=vmem, size = 0x12000, scoped, tag = 'internal scratch']
  %s0 = inlined_call_operand.vmem [shape: f32[2,4,256], index: 0, kind: input, shape index: {}]
  %s1 = inlined_call_operand.hbm [shape: f32[4,4,36], index: 1, kind: input, shape index: {}]
  %s2 = inlined_call_operand.vmem [shape: f32[4,4,1], index: 2, kind: input, shape index: {}]
  %s3 = inlined_call_operand.hbm [shape: f32[2,4,256], index: 3, kind: output, shape index: {}]
  %s4 = sld [smem:[#allocation0]]
  $region49: #{tpu_custom_call.1} parent=0
    _
  %s6 = ssub.s32 1, %s4
  %s7 = scalar_select 0, %s6, %s4
  $region1: #{tpu_custom_call.1} parent=0
    #allocation2 [shape = 'u8[8192]{0}', space=vmem, size = 0x2000, scoped, tag = 'input window, operand 1, single buffered']
    #allocation3 [shape = 's32[2]{0}', space=sflag, size = 0x8, scoped, tag = 'scoped memory for tpu_custom_call.1']
    #allocation4 [shape = 's32[2]{0}', space=sflag, size = 0x8, scoped, tag = 'scoped memory for tpu_custom_call.1']
    #allocation5 [shape = 'u8[8192]{0}', space=vmem, size = 0x2000, scoped, tag = 'output window, operand 0']
    %8 = vsyncpa [#allocation3], 0
    %9 = vsyncpa [#allocation4], 0
    %s10 = scalar_lea.sflag [#allocation4], 1
    %11 = vsyncpa %s10, 0
    loop: start=0, step=1, limit=4
    $region2: #{tpu_custom_call.1} parent=1 // loop_pre_header
      _
    $region3: #{tpu_custom_call.1} parent=1 // loop_header
      %s13 = sphi 0, %s17
      %p14 = scmp.ge.s32.totalorder %s13, 4
      %s23 = sphi 0, %s25
      %s26 = sphi 0, %s23
      %s27 = sphi 0, %s26
      %s43 = sphi 0, %s27
      %s47 = sphi 0, %s47
      %s49 = sphi 0, %s47
      %s50 = sphi 0, %s49
      %s64 = sphi 0, %s50
      %s68 = sphi 0, %s68
      %s70 = sphi 0, %s68
      %s71 = sphi 0, %s70
      %s85 = sphi 0, %s71
      %s91 = sphi 0, %s93
      %s94 = sphi 0, %s91
      %s95 = sphi 0, %s94
      %s111 = sphi 0, %s95
    $region4: #{tpu_custom_call.1} parent=1 // loop_header_branch
      %16 = sbr.rel (%p14) target = $region8
    $region5: #{tpu_custom_call.1} parent=1 // loop_body
      %s18 = ssub.s32 %s13, 1
      %s19 = ssub.s32 %s13, 2
      %s20 = sadd.s32 %s13, 1
      %s21 = ssub.s32 %s13, %s20
      %p22 = scmp.eq.s32.totalorder %s21, 0
      %s24 = sadd.s32 %s23, 1
      %s25 = scalar_select %p22, %s23, %s24
      %p28 = pneg %p22
      %p29 = scmp.eq.s32.totalorder %s13, 1
      %p30 = por %p28, %p29
      %p31 = scmp.ne.s32.totalorder %s23, %s26
      %p32 = scmp.eq.s32.totalorder %s13, 0
      %p33 = por %p31, %p32
      %p34 = scmp.ne.s32.totalorder %s23, %s26
      %p35 = scmp.eq.s32.totalorder %s18, 1
      %p36 = por %p34, %p35
      %p37 = scmp.ne.s32.totalorder %s26, %s27
      %p38 = scmp.eq.s32.totalorder %s18, 0
      %p39 = por %p37, %p38
      %p40 = scmp.ne.s32.totalorder %s26, %s27
      %p41 = scmp.eq.s32.totalorder %s19, 1
      %p42 = por %p40, %p41
      %p44 = scmp.ne.s32.totalorder %s27, %s43
      %p45 = scmp.eq.s32.totalorder %s19, 0
      %p46 = por %p44, %p45
      %s48 = sadd.s32 %s47, 1
      %p51 = scmp.eq.s32.totalorder %s13, 1
      %p52 = scmp.ne.s32.totalorder %s47, %s49
      %p53 = scmp.eq.s32.totalorder %s13, 0
      %p54 = por %p52, %p53
      %p55 = scmp.ne.s32.totalorder %s47, %s49
      %p56 = scmp.eq.s32.totalorder %s18, 1
      %p57 = por %p55, %p56
      %p58 = scmp.ne.s32.totalorder %s49, %s50
      %p59 = scmp.eq.s32.totalorder %s18, 0
      %p60 = por %p58, %p59
      %p61 = scmp.ne.s32.totalorder %s49, %s50
      %p62 = scmp.eq.s32.totalorder %s19, 1
      %p63 = por %p61, %p62
      %p65 = scmp.ne.s32.totalorder %s50, %s64
      %p66 = scmp.eq.s32.totalorder %s19, 0
      %p67 = por %p65, %p66
      %s69 = sadd.s32 %s68, 1
      %p72 = scmp.eq.s32.totalorder %s13, 1
      %p73 = scmp.ne.s32.totalorder %s68, %s70
      %p74 = scmp.eq.s32.totalorder %s13, 0
      %p75 = por %p73, %p74
      %p76 = scmp.ne.s32.totalorder %s68, %s70
      %p77 = scmp.eq.s32.totalorder %s18, 1
      %p78 = por %p76, %p77
      %p79 = scmp.ne.s32.totalorder %s70, %s71
      %p80 = scmp.eq.s32.totalorder %s18, 0
      %p81 = por %p79, %p80
      %p82 = scmp.ne.s32.totalorder %s70, %s71
      %p83 = scmp.eq.s32.totalorder %s19, 1
      %p84 = por %p82, %p83
      %p86 = scmp.ne.s32.totalorder %s71, %s85
      %p87 = scmp.eq.s32.totalorder %s19, 0
      %p88 = por %p86, %p87
      %s89 = ssub.s32 %s13, %s20
      %p90 = scmp.eq.s32.totalorder %s89, 0
      %s92 = sadd.s32 %s91, 1
      %s93 = scalar_select %p90, %s91, %s92
      %p96 = pneg %p90
      %p97 = scmp.eq.s32.totalorder %s13, 1
      %p98 = por %p96, %p97
      %p99 = scmp.ne.s32.totalorder %s91, %s94
      %p100 = scmp.eq.s32.totalorder %s13, 0
      %p101 = por %p99, %p100
      %p102 = scmp.ne.s32.totalorder %s91, %s94
      %p103 = scmp.eq.s32.totalorder %s18, 1
      %p104 = por %p102, %p103
      %p105 = scmp.ne.s32.totalorder %s94, %s95
      %p106 = scmp.eq.s32.totalorder %s18, 0
      %p107 = por %p105, %p106
      %p108 = scmp.ne.s32.totalorder %s94, %s95
      %p109 = scmp.eq.s32.totalorder %s19, 1
      %p110 = por %p108, %p109
      %p112 = scmp.ne.s32.totalorder %s95, %s111
      %p113 = scmp.eq.s32.totalorder %s19, 0
      %p114 = por %p112, %p113
      %p115 = scmp.le.s32.totalorder 1, %s13
      %p116 = scmp.lt.s32.totalorder %s13, 3
      %p117 = pnand %p115, %p116
      %p118 = pneg %p117
      // Predicated region
      $region9: #{tpu_custom_call.1} parent=5 // pred_check
        _
      $region10: #{tpu_custom_call.1} parent=5 // pred_check_branch
        %120 = sbr.rel (%p117) target = $region12
      $region11: #{tpu_custom_call.1} parent=5 // pred_region
        %s121 = ssub.s32 %s13, 1
        // Predicated region
        $region13: #{tpu_custom_call.1} parent=11 // pred_check
          %p122 = pneg %p60
        $region14: #{tpu_custom_call.1} parent=11 // pred_check_branch
          %124 = sbr.rel (%p122) target = $region16
        $region15: #{tpu_custom_call.1} parent=11 // pred_region
          %s126 = ssub.s32 256, 256
          %127 = vsyncadd [#allocation3], %s126
          %s128 = sshll.u32 [#allocation2], 4
          %s129 = int_to_ptr.vmem [resolvable:$true] %s128
          %134 = dma.hbm_to_vmem [thread:$0]  %s1, 256, %s129, [#allocation3], 64, 64, 4
        $region16: #{tpu_custom_call.1} parent=11 // pred_fallthru
          _
        // Predicated region
        $region17: #{tpu_custom_call.1} parent=11 // pred_check
          %p135 = pneg %p81
        $region18: #{tpu_custom_call.1} parent=11 // pred_check_branch
          %137 = sbr.rel (%p135) target = $region20
        $region19: #{tpu_custom_call.1} parent=11 // pred_region
          _
        $region20: #{tpu_custom_call.1} parent=11 // pred_fallthru
          _
      $region12: #{tpu_custom_call.1} parent=5 // pred_fallthru
        _
      %p138 = scmp.lt.s32.totalorder %s13, 2
      // Predicated region
      $region21: #{tpu_custom_call.1} parent=5 // pred_check
        %p139 = pneg %p138
      $region22: #{tpu_custom_call.1} parent=5 // pred_check_branch
        %141 = sbr.rel (%p139) target = $region24
      $region23: #{tpu_custom_call.1} parent=5 // pred_region
        // Predicated region
        $region25: #{tpu_custom_call.1} parent=23 // pred_check
          %p142 = pneg %p33
        $region26: #{tpu_custom_call.1} parent=23 // pred_check_branch
          %144 = sbr.rel (%p142) target = $region28
        $region27: #{tpu_custom_call.1} parent=23 // pred_region
          %p145 = scmp.lt.s32.totalorder %s13, 1
          %s146 = scalar_select %p145, %s13, 1
          %s147 = smul.addr %s146, 2
          %s148 = smul.addr %s147, 4
          %s149 = scalar_lea.vmem %s0, %s148
        $region28: #{tpu_custom_call.1} parent=23 // pred_fallthru
          _
      $region24: #{tpu_custom_call.1} parent=5 // pred_fallthru
        _
      %p150 = scmp.le.s32.totalorder 1, %s13
      %p151 = scmp.lt.s32.totalorder %s13, 3
      %p152 = pnand %p150, %p151
      %p153 = pneg %p152
      // Predicated region
      $region29: #{tpu_custom_call.1} parent=5 // pred_check
        _
      $region30: #{tpu_custom_call.1} parent=5 // pred_check_branch
        %155 = sbr.rel (%p152) target = $region32
      $region31: #{tpu_custom_call.1} parent=5 // pred_region
        %s156 = ssub.s32 %s13, 1
        // Predicated region
        $region33: #{tpu_custom_call.1} parent=31 // pred_check
          %p157 = pneg %p60
        $region34: #{tpu_custom_call.1} parent=31 // pred_check_branch
          %159 = sbr.rel (%p157) target = $region36
        $region35: #{tpu_custom_call.1} parent=31 // pred_region
          %160 = dma.done [#allocation3], 256
        $region36: #{tpu_custom_call.1} parent=31 // pred_fallthru
          _
        %p161 = scmp.lt.s32.totalorder %s18, 1
        %s162 = scalar_select %p161, %s18, 1
        %s163 = smul.addr %s162, 2
        %s164 = smul.addr %s163, 4
        %s165 = scalar_lea.vmem %s0, %s164
        %p166 = pneg %p39
        %p167 = pneg %p36
        %p168 = pneg %p60
        %p169 = pneg %p57
        %p170 = pneg %p81
        %p171 = pneg %p78
        %p172 = pneg %p107
        %p173 = pneg %p104
        %s174 = sand.u32 %s94, 1
        %s175 = scalar_lea.sflag [#allocation4], %s174
        %s176 = sand.u32 %s94, 1
        %s177 = smul.addr %s176, 8
        %s178 = scalar_lea.vmem [#allocation5], %s177
        %p179 = scmp.lt.s32.totalorder %s18, 1
        %s180 = scalar_select %p179, %s18, 1
        %s181 = smul.addr %s180, 2
        %s182 = smul.addr %s181, 4
        %s183 = scalar_lea.vmem %s0, %s182
        %v184 = vlaneseq
        %v185 = vand.u32 %v184, 127
        %v186 = vadd.s32 %v185, 128
        %vm187 = vcmp.lt.s32.totalorder %v185, 0
        %v188 = vsub.s32 0, %v185
        %v189 = vsel %vm187, %v188, %v185
        %v190 = vshrl.u32 %v189, 4
        %v191 = vand.u32 %v189, 15
        %v192 = vsub.s32 0, %v191
        %v193 = vsel %vm187, %v192, %v191
        %vm194 = vcmp.lt.s32.totalorder %v186, 0
        %v195 = vsub.s32 0, %v186
        %v196 = vsel %vm194, %v195, %v186
        %v197 = vshrl.u32 %v196, 4
        %v198 = vand.u32 %v196, 15
        %v199 = vsub.s32 0, %v198
        %v200 = vsel %vm194, %v199, %v198
        %vm201 = vcmp.ne.s32.totalorder %v193, 0
        %vm202 = vcmp.ne.s32.totalorder %v200, 0
        %vm203 = vcmp.lt.s32.totalorder %v193, 0
        %vm204 = vcmp.lt.s32.totalorder %v200, 0
        %vm205 = vmand %vm203, %vm201
        %vm206 = vmand %vm204, %vm202
        %v207 = vadd.s32 %v193, 16
        %v208 = vadd.s32 %v200, 16
        %v209 = vsel %vm205, %v207, %v193
        %v210 = vsel %vm206, %v208, %v200
        %vm211 = vcmp.ge.s32.totalorder %v209, 1
        %vm212 = vcmp.ge.s32.totalorder %v210, 1
        %vm213 = vcmp.lt.s32.totalorder %v209, 15
        %vm214 = vcmp.lt.s32.totalorder %v210, 15
        %v215 = vld [vmem:[%s183] sm:$0xff]
        %v217 = vcombine.high %v215, %v215
        %218 = vrot.lane.b32.xlu0 %v215, 17
        %v219 = vpop.permute.xlu0 %218
        %220 = vrot.lane.b32.xlu0 %v217, 17
        %v221 = vpop.permute.xlu0 %220
        %vm222 = vcmask 138240
        %v223 = vsel %vm222, %v219, %v221
        %v227 = vsel %vm222, 0.0, %v219
        %v228 = vsel %vm222, %v221, 0.0
        %v229 = vsel %vm211, %v227, 0.0
        %v230 = vsel %vm212, %v223, 0.0
        %233 = vrot.lane.b32.xlu0 %v227, 126
        %v234 = vpop.permute.xlu0 %233
        %235 = vrot.lane.b32.xlu0 %v223, 126
        %v236 = vpop.permute.xlu0 %235
        %237 = vrot.lane.b32.xlu0 %v228, 126
        %v238 = vpop.permute.xlu0 %237
        %vm239 = vcmask 1031168
        %v240 = vsel %vm239, %v234, %v236
        %v241 = vsel %vm239, %v236, %v238
        %v244 = vsel %vm213, %v240, 0.0
        %v245 = vsel %vm214, %v241, 0.0
        %246 = vrot.lane.b32.xlu0 %v227, 112
        %v247 = vpop.permute.xlu0 %246
        %248 = vrot.lane.b32.xlu0 %v223, 112
        %v249 = vpop.permute.xlu0 %248
        %250 = vrot.lane.b32.xlu0 %v228, 112
        %v251 = vpop.permute.xlu0 %250
        %vm252 = vcmask 916480
        %v253 = vsel %vm252, %v247, %v249
        %v254 = vsel %vm252, %v249, %v251
        %v257 = vsel %vm211, %v253, 0.0
        %v258 = vsel %vm212, %v254, 0.0
        %259 = vrot.lane.b32.xlu0 %v227, 110
        %v260 = vpop.permute.xlu0 %259
        %261 = vrot.lane.b32.xlu0 %v223, 110
        %v262 = vpop.permute.xlu0 %261
        %263 = vrot.lane.b32.xlu0 %v228, 110
        %v264 = vpop.permute.xlu0 %263
        %vm265 = vcmask 900096
        %v266 = vsel %vm265, %v260, %v262
        %v267 = vsel %vm265, %v262, %v264
        %v270 = vsel %vm213, %v266, 0.0
        %v271 = vsel %vm214, %v267, 0.0
        %272 = vrot.lane.b32.xlu0 %v227, 96
        %v273 = vpop.permute.xlu0 %272
        %274 = vrot.lane.b32.xlu0 %v223, 96
        %v275 = vpop.permute.xlu0 %274
        %276 = vrot.lane.b32.xlu0 %v228, 96
        %v277 = vpop.permute.xlu0 %276
        %vm278 = vcmask 785408
        %v279 = vsel %vm278, %v273, %v275
        %v280 = vsel %vm278, %v275, %v277
        %v283 = vsel %vm211, %v279, 0.0
        %v284 = vsel %vm212, %v280, 0.0
        %285 = vrot.lane.b32.xlu0 %v227, 94
        %v286 = vpop.permute.xlu0 %285
        %287 = vrot.lane.b32.xlu0 %v223, 94
        %v288 = vpop.permute.xlu0 %287
        %289 = vrot.lane.b32.xlu0 %v228, 94
        %v290 = vpop.permute.xlu0 %289
        %vm291 = vcmask 769024
        %v292 = vsel %vm291, %v286, %v288
        %v293 = vsel %vm291, %v288, %v290
        %v296 = vsel %vm213, %v292, 0.0
        %v297 = vsel %vm214, %v293, 0.0
        %v298 = vrot.slane %v227, 4
        %v299 = vrot.slane %v223, 4
        %v300 = vrot.slane %v228, 4
        %301 = vrot.lane.b32.xlu0 %v298, 127
        %v302 = vpop.permute.xlu0 %301
        %303 = vrot.lane.b32.xlu0 %v299, 127
        %v304 = vpop.permute.xlu0 %303
        %305 = vrot.lane.b32.xlu0 %v300, 127
        %v306 = vpop.permute.xlu0 %305
        %vm307 = vcmask 1039360
        %v308 = vsel %vm307, %v302, %v304
        %v309 = vsel %vm307, %v304, %v306
        %v314 = vrot.slane %v257, 4
        %v315 = vrot.slane %v258, 4
        %318 = vrot.lane.b32.xlu0 %v227, 111
        %v319 = vpop.permute.xlu0 %318
        %320 = vrot.lane.b32.xlu0 %v223, 111
        %v321 = vpop.permute.xlu0 %320
        %322 = vrot.lane.b32.xlu0 %v228, 111
        %v323 = vpop.permute.xlu0 %322
        %vm324 = vcmask 908288
        %v325 = vsel %vm324, %v319, %v321
        %v326 = vsel %vm324, %v321, %v323
        %v331 = vrot.slane %v270, 4
        %v332 = vrot.slane %v271, 4
        %335 = vrot.lane.b32.xlu0 %v298, 95
        %v336 = vpop.permute.xlu0 %335
        %337 = vrot.lane.b32.xlu0 %v299, 95
        %v338 = vpop.permute.xlu0 %337
        %339 = vrot.lane.b32.xlu0 %v300, 95
        %v340 = vpop.permute.xlu0 %339
        %vm341 = vcmask 777216
        %v342 = vsel %vm341, %v336, %v338
        %v343 = vsel %vm341, %v338, %v340
        %vm346 = vcmask 1043456
        %v347 = vsel %vm346, %v229, %v308
        %v348 = vsel %vm346, %v230, %v309
        %v349 = vsel %vm346, %v244, %v314
        %v350 = vsel %vm346, %v245, %v315
        %v351 = vsel %vm346, %v325, %v331
        %v352 = vsel %vm346, %v326, %v332
        %v353 = vsel %vm346, %v283, %v342
        %v354 = vsel %vm346, %v284, %v343
        %v355 = vld [vmem:[#allocation2] sm:$0xf]
        %v356 = vld [vmem:[%s2] sm:$0xf]
        %358 = vset.pattern.permute.xlu0 0
        %359 = vperm.xlu0 %358, %v356
        %v360 = vpop.permute.xlu0 %359
        %vm362 = vcmask 293888
        %v364 = vsel %vm362, %v355, 0
        %v367 = vsel %vm346, %v296, 0
        %v370 = vsel %vm346, %v297, 0
        %372 = vmatprep.subr.mxu0 %v348
        %373 = vmatpush1.msra.mxu0 %v347
        %374 = vmatprep.subr.mxu0 %v350
        %375 = vmatpush1.msra.mxu0 %v349
        %376 = vmatprep.subr.mxu0 %v352
        %377 = vmatpush1.msra.mxu0 %v351
        %378 = vmatprep.subr.mxu0 %v354
        %379 = vmatpush1.msra.mxu0 %v353
        %380 = vmatprep.subr.mxu0 %v370
        %381 = vmatpush1.msra.mxu0 %v367
        %382 = vmatprep.subr.mxu0 0.0
        %383 = vmatpush1.msra.mxu0 0.0
        %384 = vmatprep.subr.mxu0 0.0
        %385 = vmatpush1.msra.mxu0 0.0
        %386 = vmatprep.subr.mxu0 0.0
        %387 = vmatpush1.msra.mxu0 0.0
        %388 = vmatprep.subr.mxu0 0.0
        %389 = vmatpush1.msra.mxu0 0.0
        %390 = vmatprep.subr.mxu0 0.0
        %391 = vmatpush1.msra.mxu0 0.0
        %392 = vmatprep.subr.mxu0 0.0
        %393 = vmatpush1.msra.mxu0 0.0
        %394 = vmatprep.subr.mxu0 0.0
        %395 = vmatpush1.msra.mxu0 0.0
        %396 = vmatprep.subr.mxu0 0.0
        %397 = vmatpush1.msra.mxu0 0.0
        %398 = vmatprep.subr.mxu0 0.0
        %399 = vmatpush1.msra.mxu0 0.0
        %400 = vmatprep.subr.mxu0 0.0
        %401 = vmatpush1.msra.mxu0 0.0
        %402 = vmatprep.subr.mxu0 0.0
        %403 = vmatpush1.msra.mxu0 0.0
        %404 = vmatprep.subr.mxu0 0.0
        %405 = vmatpush1.msra.mxu0 0.0
        %406 = vmatprep.subr.mxu0 0.0
        %407 = vmatpush1.msra.mxu0 0.0
        %408 = vmatprep.subr.mxu0 0.0
        %409 = vmatpush1.msra.mxu0 0.0
        %410 = vmatprep.subr.mxu0 0.0
        %411 = vmatpush1.msra.mxu0 0.0
        %412 = vmatprep.subr.mxu0 0.0
        %413 = vmatpush1.msra.mxu0 0.0
        %414 = vmatprep.subr.mxu0 0.0
        %415 = vmatpush1.msra.mxu0 0.0
        %416 = vmatprep.subr.mxu0 0.0
        %417 = vmatpush1.msra.mxu0 0.0
        %418 = vmatprep.subr.mxu0 0.0
        %419 = vmatpush1.msra.mxu0 0.0
        %420 = vmatprep.subr.mxu0 0.0
        %421 = vmatpush1.msra.mxu0 0.0
        %422 = vmatprep.subr.mxu0 0.0
        %423 = vmatpush1.msra.mxu0 0.0
        %424 = vmatprep.subr.mxu0 0.0
        %425 = vmatpush1.msra.mxu0 0.0
        %426 = vmatprep.subr.mxu0 0.0
        %427 = vmatpush1.msra.mxu0 0.0
        %428 = vmatprep.subr.mxu0 0.0
        %429 = vmatpush1.msra.mxu0 0.0
        %430 = vmatprep.subr.mxu0 0.0
        %431 = vmatpush1.msra.mxu0 0.0
        %432 = vmatprep.subr.mxu0 0.0
        %433 = vmatpush1.msra.mxu0 0.0
        %434 = vmatprep.subr.mxu0 0.0
        %435 = vmatpush1.msra.mxu0 0.0
        %436 = vmatprep.mubr.f32.mxu0 0.0
        %437 = vmatmul.mubr.f32.gmra.mrb[0].mxu0 %v364
        %v438 = vpop.f32.mrb[0].mxu0
        %v439 = vadd.f32 %v360, %v438
        %v440 = vpop.f32.mrb[0].mxu0
        %v441 = vadd.f32 %v360, %v440
        %442 = vdwg.mxu0
        %v443 = vmax.f32 %v439, 0.0
        %v444 = vmax.f32 %v441, 0.0
        %447 = vrot.lane.b32.xlu0 %v443, 17
        %v448 = vpop.permute.xlu0 %447
        %449 = vrot.lane.b32.xlu0 %v444, 17
        %v450 = vpop.permute.xlu0 %449
        %v451 = vsel %vm222, %v448, %v450
        %v455 = vsel %vm222, 0.0, %v448
        %v456 = vsel %vm222, %v450, 0.0
        %v457 = vsel %vm211, %v455, 0.0
        %v458 = vsel %vm212, %v451, 0.0
        %461 = vrot.lane.b32.xlu0 %v455, 126
        %v462 = vpop.permute.xlu0 %461
        %463 = vrot.lane.b32.xlu0 %v451, 126
        %v464 = vpop.permute.xlu0 %463
        %465 = vrot.lane.b32.xlu0 %v456, 126
        %v466 = vpop.permute.xlu0 %465
        %v467 = vsel %vm239, %v462, %v464
        %v468 = vsel %vm239, %v464, %v466
        %v471 = vsel %vm213, %v467, 0.0
        %v472 = vsel %vm214, %v468, 0.0
        %473 = vrot.lane.b32.xlu0 %v455, 112
        %v474 = vpop.permute.xlu0 %473
        %475 = vrot.lane.b32.xlu0 %v451, 112
        %v476 = vpop.permute.xlu0 %475
        %477 = vrot.lane.b32.xlu0 %v456, 112
        %v478 = vpop.permute.xlu0 %477
        %v479 = vsel %vm252, %v474, %v476
        %v480 = vsel %vm252, %v476, %v478
        %v483 = vsel %vm211, %v479, 0.0
        %v484 = vsel %vm212, %v480, 0.0
        %485 = vrot.lane.b32.xlu0 %v455, 110
        %v486 = vpop.permute.xlu0 %485
        %487 = vrot.lane.b32.xlu0 %v451, 110
        %v488 = vpop.permute.xlu0 %487
        %489 = vrot.lane.b32.xlu0 %v456, 110
        %v490 = vpop.permute.xlu0 %489
        %v491 = vsel %vm265, %v486, %v488
        %v492 = vsel %vm265, %v488, %v490
        %v495 = vsel %vm213, %v491, 0.0
        %v496 = vsel %vm214, %v492, 0.0
        %497 = vrot.lane.b32.xlu0 %v455, 96
        %v498 = vpop.permute.xlu0 %497
        %499 = vrot.lane.b32.xlu0 %v451, 96
        %v500 = vpop.permute.xlu0 %499
        %501 = vrot.lane.b32.xlu0 %v456, 96
        %v502 = vpop.permute.xlu0 %501
        %v503 = vsel %vm278, %v498, %v500
        %v504 = vsel %vm278, %v500, %v502
        %v507 = vsel %vm211, %v503, 0.0
        %v508 = vsel %vm212, %v504, 0.0
        %509 = vrot.lane.b32.xlu0 %v455, 94
        %v510 = vpop.permute.xlu0 %509
        %511 = vrot.lane.b32.xlu0 %v451, 94
        %v512 = vpop.permute.xlu0 %511
        %513 = vrot.lane.b32.xlu0 %v456, 94
        %v514 = vpop.permute.xlu0 %513
        %v515 = vsel %vm291, %v510, %v512
        %v516 = vsel %vm291, %v512, %v514
        %v519 = vsel %vm213, %v515, 0.0
        %v520 = vsel %vm214, %v516, 0.0
        %v521 = vrot.slane %v455, 4
        %v522 = vrot.slane %v451, 4
        %v523 = vrot.slane %v456, 4
        %524 = vrot.lane.b32.xlu0 %v521, 127
        %v525 = vpop.permute.xlu0 %524
        %526 = vrot.lane.b32.xlu0 %v522, 127
        %v527 = vpop.permute.xlu0 %526
        %528 = vrot.lane.b32.xlu0 %v523, 127
        %v529 = vpop.permute.xlu0 %528
        %v530 = vsel %vm307, %v525, %v527
        %v531 = vsel %vm307, %v527, %v529
        %v536 = vrot.slane %v483, 4
        %v537 = vrot.slane %v484, 4
        %540 = vrot.lane.b32.xlu0 %v455, 111
        %v541 = vpop.permute.xlu0 %540
        %542 = vrot.lane.b32.xlu0 %v451, 111
        %v543 = vpop.permute.xlu0 %542
        %544 = vrot.lane.b32.xlu0 %v456, 111
        %v545 = vpop.permute.xlu0 %544
        %v546 = vsel %vm324, %v541, %v543
        %v547 = vsel %vm324, %v543, %v545
        %v552 = vrot.slane %v495, 4
        %v553 = vrot.slane %v496, 4
        %556 = vrot.lane.b32.xlu0 %v521, 95
        %v557 = vpop.permute.xlu0 %556
        %558 = vrot.lane.b32.xlu0 %v522, 95
        %v559 = vpop.permute.xlu0 %558
        %560 = vrot.lane.b32.xlu0 %v523, 95
        %v561 = vpop.permute.xlu0 %560
        %v562 = vsel %vm341, %v557, %v559
        %v563 = vsel %vm341, %v559, %v561
        %v566 = vsel %vm346, %v457, %v530
        %v567 = vsel %vm346, %v458, %v531
        %v568 = vsel %vm346, %v471, %v536
        %v569 = vsel %vm346, %v472, %v537
        %v570 = vsel %vm346, %v546, %v552
        %v571 = vsel %vm346, %v547, %v553
        %v572 = vsel %vm346, %v507, %v562
        %v573 = vsel %vm346, %v508, %v563
        %s574 = scalar_lea.vmem [#allocation2], 4
        %v575 = vld [vmem:[%s574] sm:$0xf]
        %s576 = scalar_lea.vmem %s2, 4
        %v577 = vld [vmem:[%s576] sm:$0xf]
        %579 = vset.pattern.permute.xlu0 0
        %580 = vperm.xlu0 %579, %v577
        %v581 = vpop.permute.xlu0 %580
        %v584 = vsel %vm362, %v575, 0
        %v587 = vsel %vm346, %v519, 0
        %v590 = vsel %vm346, %v520, 0
        %592 = vmatprep.subr.mxu0 %v567
        %593 = vmatpush1.msra.mxu0 %v566
        %594 = vmatprep.subr.mxu0 %v569
        %595 = vmatpush1.msra.mxu0 %v568
        %596 = vmatprep.subr.mxu0 %v571
        %597 = vmatpush1.msra.mxu0 %v570
        %598 = vmatprep.subr.mxu0 %v573
        %599 = vmatpush1.msra.mxu0 %v572
        %600 = vmatprep.subr.mxu0 %v590
        %601 = vmatpush1.msra.mxu0 %v587
        %602 = vmatprep.subr.mxu0 0.0
        %603 = vmatpush1.msra.mxu0 0.0
        %604 = vmatprep.subr.mxu0 0.0
        %605 = vmatpush1.msra.mxu0 0.0
        %606 = vmatprep.subr.mxu0 0.0
        %607 = vmatpush1.msra.mxu0 0.0
        %608 = vmatprep.subr.mxu0 0.0
        %609 = vmatpush1.msra.mxu0 0.0
        %610 = vmatprep.subr.mxu0 0.0
        %611 = vmatpush1.msra.mxu0 0.0
        %612 = vmatprep.subr.mxu0 0.0
        %613 = vmatpush1.msra.mxu0 0.0
        %614 = vmatprep.subr.mxu0 0.0
        %615 = vmatpush1.msra.mxu0 0.0
        %616 = vmatprep.subr.mxu0 0.0
        %617 = vmatpush1.msra.mxu0 0.0
        %618 = vmatprep.subr.mxu0 0.0
        %619 = vmatpush1.msra.mxu0 0.0
        %620 = vmatprep.subr.mxu0 0.0
        %621 = vmatpush1.msra.mxu0 0.0
        %622 = vmatprep.subr.mxu0 0.0
        %623 = vmatpush1.msra.mxu0 0.0
        %624 = vmatprep.subr.mxu0 0.0
        %625 = vmatpush1.msra.mxu0 0.0
        %626 = vmatprep.subr.mxu0 0.0
        %627 = vmatpush1.msra.mxu0 0.0
        %628 = vmatprep.subr.mxu0 0.0
        %629 = vmatpush1.msra.mxu0 0.0
        %630 = vmatprep.subr.mxu0 0.0
        %631 = vmatpush1.msra.mxu0 0.0
        %632 = vmatprep.subr.mxu0 0.0
        %633 = vmatpush1.msra.mxu0 0.0
        %634 = vmatprep.subr.mxu0 0.0
        %635 = vmatpush1.msra.mxu0 0.0
        %636 = vmatprep.subr.mxu0 0.0
        %637 = vmatpush1.msra.mxu0 0.0
        %638 = vmatprep.subr.mxu0 0.0
        %639 = vmatpush1.msra.mxu0 0.0
        %640 = vmatprep.subr.mxu0 0.0
        %641 = vmatpush1.msra.mxu0 0.0
        %642 = vmatprep.subr.mxu0 0.0
        %643 = vmatpush1.msra.mxu0 0.0
        %644 = vmatprep.subr.mxu0 0.0
        %645 = vmatpush1.msra.mxu0 0.0
        %646 = vmatprep.subr.mxu0 0.0
        %647 = vmatpush1.msra.mxu0 0.0
        %648 = vmatprep.subr.mxu0 0.0
        %649 = vmatpush1.msra.mxu0 0.0
        %650 = vmatprep.subr.mxu0 0.0
        %651 = vmatpush1.msra.mxu0 0.0
        %652 = vmatprep.subr.mxu0 0.0
        %653 = vmatpush1.msra.mxu0 0.0
        %654 = vmatprep.subr.mxu0 0.0
        %655 = vmatpush1.msra.mxu0 0.0
        %656 = vmatprep.mubr.f32.mxu0 0.0
        %657 = vmatmul.mubr.f32.gmra.mrb[0].mxu0 %v584
        %v658 = vpop.f32.mrb[0].mxu0
        %v659 = vadd.f32 %v581, %v658
        %v660 = vpop.f32.mrb[0].mxu0
        %v661 = vadd.f32 %v581, %v660
        %662 = vdwg.mxu0
        %v663 = vmax.f32 %v659, 0.0
        %v664 = vmax.f32 %v661, 0.0
        %v666 = vadd.f32 %v663, %v215
        %v667 = vadd.f32 %v664, %v217
        %670 = vrot.lane.b32.xlu0 %v666, 17
        %v671 = vpop.permute.xlu0 %670
        %672 = vrot.lane.b32.xlu0 %v667, 17
        %v673 = vpop.permute.xlu0 %672
        %v674 = vsel %vm222, %v671, %v673
        %v678 = vsel %vm222, 0.0, %v671
        %v679 = vsel %vm222, %v673, 0.0
        %v680 = vsel %vm211, %v678, 0.0
        %v681 = vsel %vm212, %v674, 0.0
        %684 = vrot.lane.b32.xlu0 %v678, 126
        %v685 = vpop.permute.xlu0 %684
        %686 = vrot.lane.b32.xlu0 %v674, 126
        %v687 = vpop.permute.xlu0 %686
        %688 = vrot.lane.b32.xlu0 %v679, 126
        %v689 = vpop.permute.xlu0 %688
        %v690 = vsel %vm239, %v685, %v687
        %v691 = vsel %vm239, %v687, %v689
        %v694 = vsel %vm213, %v690, 0.0
        %v695 = vsel %vm214, %v691, 0.0
        %696 = vrot.lane.b32.xlu0 %v678, 112
        %v697 = vpop.permute.xlu0 %696
        %698 = vrot.lane.b32.xlu0 %v674, 112
        %v699 = vpop.permute.xlu0 %698
        %700 = vrot.lane.b32.xlu0 %v679, 112
        %v701 = vpop.permute.xlu0 %700
        %v702 = vsel %vm252, %v697, %v699
        %v703 = vsel %vm252, %v699, %v701
        %v706 = vsel %vm211, %v702, 0.0
        %v707 = vsel %vm212, %v703, 0.0
        %708 = vrot.lane.b32.xlu0 %v678, 110
        %v709 = vpop.permute.xlu0 %708
        %710 = vrot.lane.b32.xlu0 %v674, 110
        %v711 = vpop.permute.xlu0 %710
        %712 = vrot.lane.b32.xlu0 %v679, 110
        %v713 = vpop.permute.xlu0 %712
        %v714 = vsel %vm265, %v709, %v711
        %v715 = vsel %vm265, %v711, %v713
        %v718 = vsel %vm213, %v714, 0.0
        %v719 = vsel %vm214, %v715, 0.0
        %720 = vrot.lane.b32.xlu0 %v678, 96
        %v721 = vpop.permute.xlu0 %720
        %722 = vrot.lane.b32.xlu0 %v674, 96
        %v723 = vpop.permute.xlu0 %722
        %724 = vrot.lane.b32.xlu0 %v679, 96
        %v725 = vpop.permute.xlu0 %724
        %v726 = vsel %vm278, %v721, %v723
        %v727 = vsel %vm278, %v723, %v725
        %v730 = vsel %vm211, %v726, 0.0
        %v731 = vsel %vm212, %v727, 0.0
        %732 = vrot.lane.b32.xlu0 %v678, 94
        %v733 = vpop.permute.xlu0 %732
        %734 = vrot.lane.b32.xlu0 %v674, 94
        %v735 = vpop.permute.xlu0 %734
        %736 = vrot.lane.b32.xlu0 %v679, 94
        %v737 = vpop.permute.xlu0 %736
        %v738 = vsel %vm291, %v733, %v735
        %v739 = vsel %vm291, %v735, %v737
        %v742 = vsel %vm213, %v738, 0.0
        %v743 = vsel %vm214, %v739, 0.0
        %v744 = vrot.slane %v678, 4
        %v745 = vrot.slane %v674, 4
        %v746 = vrot.slane %v679, 4
        %747 = vrot.lane.b32.xlu0 %v744, 127
        %v748 = vpop.permute.xlu0 %747
        %749 = vrot.lane.b32.xlu0 %v745, 127
        %v750 = vpop.permute.xlu0 %749
        %751 = vrot.lane.b32.xlu0 %v746, 127
        %v752 = vpop.permute.xlu0 %751
        %v753 = vsel %vm307, %v748, %v750
        %v754 = vsel %vm307, %v750, %v752
        %v759 = vrot.slane %v706, 4
        %v760 = vrot.slane %v707, 4
        %763 = vrot.lane.b32.xlu0 %v678, 111
        %v764 = vpop.permute.xlu0 %763
        %765 = vrot.lane.b32.xlu0 %v674, 111
        %v766 = vpop.permute.xlu0 %765
        %767 = vrot.lane.b32.xlu0 %v679, 111
        %v768 = vpop.permute.xlu0 %767
        %v769 = vsel %vm324, %v764, %v766
        %v770 = vsel %vm324, %v766, %v768
        %v775 = vrot.slane %v718, 4
        %v776 = vrot.slane %v719, 4
        %779 = vrot.lane.b32.xlu0 %v744, 95
        %v780 = vpop.permute.xlu0 %779
        %781 = vrot.lane.b32.xlu0 %v745, 95
        %v782 = vpop.permute.xlu0 %781
        %783 = vrot.lane.b32.xlu0 %v746, 95
        %v784 = vpop.permute.xlu0 %783
        %v785 = vsel %vm341, %v780, %v782
        %v786 = vsel %vm341, %v782, %v784
        %v789 = vsel %vm346, %v680, %v753
        %v790 = vsel %vm346, %v681, %v754
        %v791 = vsel %vm346, %v694, %v759
        %v792 = vsel %vm346, %v695, %v760
        %v793 = vsel %vm346, %v769, %v775
        %v794 = vsel %vm346, %v770, %v776
        %v795 = vsel %vm346, %v730, %v785
        %v796 = vsel %vm346, %v731, %v786
        %s797 = scalar_lea.vmem [#allocation2], 8
        %v798 = vld [vmem:[%s797] sm:$0xf]
        %s799 = scalar_lea.vmem %s2, 8
        %v800 = vld [vmem:[%s799] sm:$0xf]
        %802 = vset.pattern.permute.xlu0 0
        %803 = vperm.xlu0 %802, %v800
        %v804 = vpop.permute.xlu0 %803
        %v807 = vsel %vm362, %v798, 0
        %v810 = vsel %vm346, %v742, 0
        %v813 = vsel %vm346, %v743, 0
        %815 = vmatprep.subr.mxu0 %v790
        %816 = vmatpush1.msra.mxu0 %v789
        %817 = vmatprep.subr.mxu0 %v792
        %818 = vmatpush1.msra.mxu0 %v791
        %819 = vmatprep.subr.mxu0 %v794
        %820 = vmatpush1.msra.mxu0 %v793
        %821 = vmatprep.subr.mxu0 %v796
        %822 = vmatpush1.msra.mxu0 %v795
        %823 = vmatprep.subr.mxu0 %v813
        %824 = vmatpush1.msra.mxu0 %v810
        %825 = vmatprep.subr.mxu0 0.0
        %826 = vmatpush1.msra.mxu0 0.0
        %827 = vmatprep.subr.mxu0 0.0
        %828 = vmatpush1.msra.mxu0 0.0
        %829 = vmatprep.subr.mxu0 0.0
        %830 = vmatpush1.msra.mxu0 0.0
        %831 = vmatprep.subr.mxu0 0.0
        %832 = vmatpush1.msra.mxu0 0.0
        %833 = vmatprep.subr.mxu0 0.0
        %834 = vmatpush1.msra.mxu0 0.0
        %835 = vmatprep.subr.mxu0 0.0
        %836 = vmatpush1.msra.mxu0 0.0
        %837 = vmatprep.subr.mxu0 0.0
        %838 = vmatpush1.msra.mxu0 0.0
        %839 = vmatprep.subr.mxu0 0.0
        %840 = vmatpush1.msra.mxu0 0.0
        %841 = vmatprep.subr.mxu0 0.0
        %842 = vmatpush1.msra.mxu0 0.0
        %843 = vmatprep.subr.mxu0 0.0
        %844 = vmatpush1.msra.mxu0 0.0
        %845 = vmatprep.subr.mxu0 0.0
        %846 = vmatpush1.msra.mxu0 0.0
        %847 = vmatprep.subr.mxu0 0.0
        %848 = vmatpush1.msra.mxu0 0.0
        %849 = vmatprep.subr.mxu0 0.0
        %850 = vmatpush1.msra.mxu0 0.0
        %851 = vmatprep.subr.mxu0 0.0
        %852 = vmatpush1.msra.mxu0 0.0
        %853 = vmatprep.subr.mxu0 0.0
        %854 = vmatpush1.msra.mxu0 0.0
        %855 = vmatprep.subr.mxu0 0.0
        %856 = vmatpush1.msra.mxu0 0.0
        %857 = vmatprep.subr.mxu0 0.0
        %858 = vmatpush1.msra.mxu0 0.0
        %859 = vmatprep.subr.mxu0 0.0
        %860 = vmatpush1.msra.mxu0 0.0
        %861 = vmatprep.subr.mxu0 0.0
        %862 = vmatpush1.msra.mxu0 0.0
        %863 = vmatprep.subr.mxu0 0.0
        %864 = vmatpush1.msra.mxu0 0.0
        %865 = vmatprep.subr.mxu0 0.0
        %866 = vmatpush1.msra.mxu0 0.0
        %867 = vmatprep.subr.mxu0 0.0
        %868 = vmatpush1.msra.mxu0 0.0
        %869 = vmatprep.subr.mxu0 0.0
        %870 = vmatpush1.msra.mxu0 0.0
        %871 = vmatprep.subr.mxu0 0.0
        %872 = vmatpush1.msra.mxu0 0.0
        %873 = vmatprep.subr.mxu0 0.0
        %874 = vmatpush1.msra.mxu0 0.0
        %875 = vmatprep.subr.mxu0 0.0
        %876 = vmatpush1.msra.mxu0 0.0
        %877 = vmatprep.subr.mxu0 0.0
        %878 = vmatpush1.msra.mxu0 0.0
        %879 = vmatprep.mubr.f32.mxu0 0.0
        %880 = vmatmul.mubr.f32.gmra.mrb[0].mxu0 %v807
        %v881 = vpop.f32.mrb[0].mxu0
        %v882 = vadd.f32 %v804, %v881
        %v883 = vpop.f32.mrb[0].mxu0
        %v884 = vadd.f32 %v804, %v883
        %885 = vdwg.mxu0
        %v886 = vmax.f32 %v882, 0.0
        %v887 = vmax.f32 %v884, 0.0
        %890 = vrot.lane.b32.xlu0 %v886, 17
        %v891 = vpop.permute.xlu0 %890
        %892 = vrot.lane.b32.xlu0 %v887, 17
        %v893 = vpop.permute.xlu0 %892
        %v894 = vsel %vm222, %v891, %v893
        %v898 = vsel %vm222, 0.0, %v891
        %v899 = vsel %vm222, %v893, 0.0
        %v900 = vsel %vm211, %v898, 0.0
        %v901 = vsel %vm212, %v894, 0.0
        %904 = vrot.lane.b32.xlu0 %v898, 126
        %v905 = vpop.permute.xlu0 %904
        %906 = vrot.lane.b32.xlu0 %v894, 126
        %v907 = vpop.permute.xlu0 %906
        %908 = vrot.lane.b32.xlu0 %v899, 126
        %v909 = vpop.permute.xlu0 %908
        %v910 = vsel %vm239, %v905, %v907
        %v911 = vsel %vm239, %v907, %v909
        %v914 = vsel %vm213, %v910, 0.0
        %v915 = vsel %vm214, %v911, 0.0
        %916 = vrot.lane.b32.xlu0 %v898, 112
        %v917 = vpop.permute.xlu0 %916
        %918 = vrot.lane.b32.xlu0 %v894, 112
        %v919 = vpop.permute.xlu0 %918
        %920 = vrot.lane.b32.xlu0 %v899, 112
        %v921 = vpop.permute.xlu0 %920
        %v922 = vsel %vm252, %v917, %v919
        %v923 = vsel %vm252, %v919, %v921
        %v926 = vsel %vm211, %v922, 0.0
        %v927 = vsel %vm212, %v923, 0.0
        %928 = vrot.lane.b32.xlu0 %v898, 110
        %v929 = vpop.permute.xlu0 %928
        %930 = vrot.lane.b32.xlu0 %v894, 110
        %v931 = vpop.permute.xlu0 %930
        %932 = vrot.lane.b32.xlu0 %v899, 110
        %v933 = vpop.permute.xlu0 %932
        %v934 = vsel %vm265, %v929, %v931
        %v935 = vsel %vm265, %v931, %v933
        %v938 = vsel %vm213, %v934, 0.0
        %v939 = vsel %vm214, %v935, 0.0
        %940 = vrot.lane.b32.xlu0 %v898, 96
        %v941 = vpop.permute.xlu0 %940
        %942 = vrot.lane.b32.xlu0 %v894, 96
        %v943 = vpop.permute.xlu0 %942
        %944 = vrot.lane.b32.xlu0 %v899, 96
        %v945 = vpop.permute.xlu0 %944
        %v946 = vsel %vm278, %v941, %v943
        %v947 = vsel %vm278, %v943, %v945
        %v950 = vsel %vm211, %v946, 0.0
        %v951 = vsel %vm212, %v947, 0.0
        %952 = vrot.lane.b32.xlu0 %v898, 94
        %v953 = vpop.permute.xlu0 %952
        %954 = vrot.lane.b32.xlu0 %v894, 94
        %v955 = vpop.permute.xlu0 %954
        %956 = vrot.lane.b32.xlu0 %v899, 94
        %v957 = vpop.permute.xlu0 %956
        %v958 = vsel %vm291, %v953, %v955
        %v959 = vsel %vm291, %v955, %v957
        %v962 = vsel %vm213, %v958, 0.0
        %v963 = vsel %vm214, %v959, 0.0
        %v964 = vrot.slane %v898, 4
        %v965 = vrot.slane %v894, 4
        %v966 = vrot.slane %v899, 4
        %967 = vrot.lane.b32.xlu0 %v964, 127
        %v968 = vpop.permute.xlu0 %967
        %969 = vrot.lane.b32.xlu0 %v965, 127
        %v970 = vpop.permute.xlu0 %969
        %971 = vrot.lane.b32.xlu0 %v966, 127
        %v972 = vpop.permute.xlu0 %971
        %v973 = vsel %vm307, %v968, %v970
        %v974 = vsel %vm307, %v970, %v972
        %v979 = vrot.slane %v926, 4
        %v980 = vrot.slane %v927, 4
        %983 = vrot.lane.b32.xlu0 %v898, 111
        %v984 = vpop.permute.xlu0 %983
        %985 = vrot.lane.b32.xlu0 %v894, 111
        %v986 = vpop.permute.xlu0 %985
        %987 = vrot.lane.b32.xlu0 %v899, 111
        %v988 = vpop.permute.xlu0 %987
        %v989 = vsel %vm324, %v984, %v986
        %v990 = vsel %vm324, %v986, %v988
        %v995 = vrot.slane %v938, 4
        %v996 = vrot.slane %v939, 4
        %999 = vrot.lane.b32.xlu0 %v964, 95
        %v1000 = vpop.permute.xlu0 %999
        %1001 = vrot.lane.b32.xlu0 %v965, 95
        %v1002 = vpop.permute.xlu0 %1001
        %1003 = vrot.lane.b32.xlu0 %v966, 95
        %v1004 = vpop.permute.xlu0 %1003
        %v1005 = vsel %vm341, %v1000, %v1002
        %v1006 = vsel %vm341, %v1002, %v1004
        %v1009 = vsel %vm346, %v900, %v973
        %v1010 = vsel %vm346, %v901, %v974
        %v1011 = vsel %vm346, %v914, %v979
        %v1012 = vsel %vm346, %v915, %v980
        %v1013 = vsel %vm346, %v989, %v995
        %v1014 = vsel %vm346, %v990, %v996
        %v1015 = vsel %vm346, %v950, %v1005
        %v1016 = vsel %vm346, %v951, %v1006
        %s1017 = scalar_lea.vmem [#allocation2], 12
        %v1018 = vld [vmem:[%s1017] sm:$0xf]
        %s1019 = scalar_lea.vmem %s2, 12
        %v1020 = vld [vmem:[%s1019] sm:$0xf]
        %1022 = vset.pattern.permute.xlu0 0
        %1023 = vperm.xlu0 %1022, %v1020
        %v1024 = vpop.permute.xlu0 %1023
        %v1027 = vsel %vm362, %v1018, 0
        %v1030 = vsel %vm346, %v962, 0
        %v1033 = vsel %vm346, %v963, 0
        %1035 = vmatprep.subr.mxu0 %v1010
        %1036 = vmatpush1.msra.mxu0 %v1009
        %1037 = vmatprep.subr.mxu0 %v1012
        %1038 = vmatpush1.msra.mxu0 %v1011
        %1039 = vmatprep.subr.mxu0 %v1014
        %1040 = vmatpush1.msra.mxu0 %v1013
        %1041 = vmatprep.subr.mxu0 %v1016
        %1042 = vmatpush1.msra.mxu0 %v1015
        %1043 = vmatprep.subr.mxu0 %v1033
        %1044 = vmatpush1.msra.mxu0 %v1030
        %1045 = vmatprep.subr.mxu0 0.0
        %1046 = vmatpush1.msra.mxu0 0.0
        %1047 = vmatprep.subr.mxu0 0.0
        %1048 = vmatpush1.msra.mxu0 0.0
        %1049 = vmatprep.subr.mxu0 0.0
        %1050 = vmatpush1.msra.mxu0 0.0
        %1051 = vmatprep.subr.mxu0 0.0
        %1052 = vmatpush1.msra.mxu0 0.0
        %1053 = vmatprep.subr.mxu0 0.0
        %1054 = vmatpush1.msra.mxu0 0.0
        %1055 = vmatprep.subr.mxu0 0.0
        %1056 = vmatpush1.msra.mxu0 0.0
        %1057 = vmatprep.subr.mxu0 0.0
        %1058 = vmatpush1.msra.mxu0 0.0
        %1059 = vmatprep.subr.mxu0 0.0
        %1060 = vmatpush1.msra.mxu0 0.0
        %1061 = vmatprep.subr.mxu0 0.0
        %1062 = vmatpush1.msra.mxu0 0.0
        %1063 = vmatprep.subr.mxu0 0.0
        %1064 = vmatpush1.msra.mxu0 0.0
        %1065 = vmatprep.subr.mxu0 0.0
        %1066 = vmatpush1.msra.mxu0 0.0
        %1067 = vmatprep.subr.mxu0 0.0
        %1068 = vmatpush1.msra.mxu0 0.0
        %1069 = vmatprep.subr.mxu0 0.0
        %1070 = vmatpush1.msra.mxu0 0.0
        %1071 = vmatprep.subr.mxu0 0.0
        %1072 = vmatpush1.msra.mxu0 0.0
        %1073 = vmatprep.subr.mxu0 0.0
        %1074 = vmatpush1.msra.mxu0 0.0
        %1075 = vmatprep.subr.mxu0 0.0
        %1076 = vmatpush1.msra.mxu0 0.0
        %1077 = vmatprep.subr.mxu0 0.0
        %1078 = vmatpush1.msra.mxu0 0.0
        %1079 = vmatprep.subr.mxu0 0.0
        %1080 = vmatpush1.msra.mxu0 0.0
        %1081 = vmatprep.subr.mxu0 0.0
        %1082 = vmatpush1.msra.mxu0 0.0
        %1083 = vmatprep.subr.mxu0 0.0
        %1084 = vmatpush1.msra.mxu0 0.0
        %1085 = vmatprep.subr.mxu0 0.0
        %1086 = vmatpush1.msra.mxu0 0.0
        %1087 = vmatprep.subr.mxu0 0.0
        %1088 = vmatpush1.msra.mxu0 0.0
        %1089 = vmatprep.subr.mxu0 0.0
        %1090 = vmatpush1.msra.mxu0 0.0
        %1091 = vmatprep.subr.mxu0 0.0
        %1092 = vmatpush1.msra.mxu0 0.0
        %1093 = vmatprep.subr.mxu0 0.0
        %1094 = vmatpush1.msra.mxu0 0.0
        %1095 = vmatprep.subr.mxu0 0.0
        %1096 = vmatpush1.msra.mxu0 0.0
        %1097 = vmatprep.subr.mxu0 0.0
        %1098 = vmatpush1.msra.mxu0 0.0
        %1099 = vmatprep.mubr.f32.mxu0 0.0
        %1100 = vmatmul.mubr.f32.gmra.mrb[0].mxu0 %v1027
        %v1101 = vpop.f32.mrb[0].mxu0
        %v1102 = vadd.f32 %v1024, %v1101
        %v1103 = vpop.f32.mrb[0].mxu0
        %v1104 = vadd.f32 %v1024, %v1103
        %1105 = vdwg.mxu0
        %v1106 = vmax.f32 %v1102, 0.0
        %v1107 = vmax.f32 %v1104, 0.0
        %v1108 = vadd.f32 %v1106, %v215
        %v1109 = vadd.f32 %v1107, %v217
        %v1112 = vcombine.low %v1108, %v1109
        %1114 = vst [vmem:[%s178] sm:$0xff] %v1112
        %s1115 = sand.u32 %s94, 1
        %s1116 = scalar_lea.sflag [#allocation4], %s1115
        %s1117 = sand.u32 %s94, 1
        %s1118 = smul.addr %s1117, 8
        %s1119 = scalar_lea.vmem [#allocation5], %s1118
        // Predicated region
        $region37: #{tpu_custom_call.1} parent=31 // pred_check
          %p1120 = pneg %p104
        $region38: #{tpu_custom_call.1} parent=31 // pred_check_branch
          %1122 = sbr.rel (%p1120) target = $region40
        $region39: #{tpu_custom_call.1} parent=31 // pred_region
          %s1124 = ssub.s32 128, 128
          %1125 = vsyncadd %s1116, %s1124
          %s1126 = smul.addr %s18, 2
          %s1127 = smul.addr %s1126, 64
          %s1128 = scalar_lea.hbm %s3, %s1127
          %s1130 = sshll.u32 %s1119, 4
          %s1131 = int_to_ptr.vmem [resolvable:$true] %s1130
          %1133 = dma.vmem_to_hbm [thread:$0]  %s1131, 128, %s1128, %s1116
        $region40: #{tpu_custom_call.1} parent=31 // pred_fallthru
          _
      $region32: #{tpu_custom_call.1} parent=5 // pred_fallthru
        _
      %p1134 = scmp.le.s32.totalorder 2, %s13
      // Predicated region
      $region41: #{tpu_custom_call.1} parent=5 // pred_check
        %p1135 = pneg %p1134
      $region42: #{tpu_custom_call.1} parent=5 // pred_check_branch
        %1137 = sbr.rel (%p1135) target = $region44
      $region43: #{tpu_custom_call.1} parent=5 // pred_region
        %s1138 = ssub.s32 %s13, 2
        // Predicated region
        $region45: #{tpu_custom_call.1} parent=43 // pred_check
          %p1139 = pneg %p110
        $region46: #{tpu_custom_call.1} parent=43 // pred_check_branch
          %1141 = sbr.rel (%p1139) target = $region48
        $region47: #{tpu_custom_call.1} parent=43 // pred_region
          %s1142 = sand.u32 %s95, 1
          %s1143 = scalar_lea.sflag [#allocation4], %s1142
          %s1144 = sand.u32 %s95, 1
          %s1145 = smul.addr %s1144, 8
          %s1146 = scalar_lea.vmem [#allocation5], %s1145
          %1147 = dma.done %s1143, 128
        $region48: #{tpu_custom_call.1} parent=43 // pred_fallthru
          _
      $region44: #{tpu_custom_call.1} parent=5 // pred_fallthru
        _
    $region6: #{tpu_custom_call.1} parent=1 // loop_footer
      %s17 = sadd.s32 1, %s13
    $region7: #{tpu_custom_call.1} parent=1 // loop_footer_branch
      %12 = sbr.rel target = $region3
    $region8: #{tpu_custom_call.1} parent=1 // loop_exit
      _
    %1148 = vsyncpa [#allocation3], 1
    %s1149 = scalar_lea.sflag [#allocation3], 1
    %1150 = vsyncpa %s1149, 1
    %1151 = vsyncpa [#allocation4], 1
    %s1152 = scalar_lea.sflag [#allocation4], 1
    %1153 = vsyncpa %s1152, 1

</llo_original>
